<compile_context>
chip_gen: v6e
topology: v6e:2x2x1
jax: 0.10.0
libtpu: 0.0.40
codegen_flags: <defaults>
</compile_context>

<pallas_src>
import functools

import jax
import jax.numpy as jnp
from jax.experimental import pallas as pl
from jax.experimental.pallas import tpu as pltpu

NEG_SLOPE = 0.01  # PyTorch nn.LeakyReLU default negative_slope


def _leaky_relu(x):
    return jnp.where(x > 0, x, NEG_SLOPE * x)


# ----------------------------------------------------------------------------
# Pallas kernel (transposed / lane-dense layout, rows on the lane axis):
#   h  = LeakyReLU(We1^T @ X^T + be1')      be1' has the all-ones emb folded in
#   h  = LeakyReLU(We2^T @ h + be2)
#   a  = tanh(Wd^T @ h + bd)
#   out^T = base^T + scale * a              scale read from SMEM
# ----------------------------------------------------------------------------
def _decoder_step_kernel(scale_ref, x_ref, base_ref,
                         we1_ref, be1_ref, we2_ref, be2_ref,
                         wd_ref, bd_ref, o_ref):
    scale = scale_ref[0]                                  # f32 scalar from SMEM
    x = x_ref[...]                                        # (6, tn)  bf16
    h = jnp.dot(we1_ref[...], x, preferred_element_type=jnp.float32)
    h = _leaky_relu(h + be1_ref[...])                     # (H, tn)  f32
    h = jnp.dot(we2_ref[...], h.astype(jnp.bfloat16),
                preferred_element_type=jnp.float32)
    h = _leaky_relu(h + be2_ref[...])                     # (H, tn)  f32
    a = jnp.dot(wd_ref[...], h.astype(jnp.bfloat16),
                preferred_element_type=jnp.float32)
    a = jnp.tanh(a + bd_ref[...])                         # (3, tn)  f32
    o_ref[...] = base_ref[...] + scale * a                # lane-dense store


def fused_state_mlp_t(x_t, base_t, we1_t, be1_c, we2_t, be2_c, wd_t, bd_c,
                      scale, *, tn_max=2048):
    """Transposed layout: x_t (6, N) bf16, base_t (3, N) f32 -> (3, N) f32."""
    f_in, n = x_t.shape
    h = we1_t.shape[0]

    tn_max = max(128, (tn_max // 128) * 128)
    n128 = pl.cdiv(n, 128) * 128
    tn = min(tn_max, n128)
    n_pad = pl.cdiv(n128, tn) * tn

    x_p = jnp.pad(x_t, ((0, 0), (0, n_pad - n)))
    b_p = jnp.pad(base_t, ((0, 0), (0, n_pad - n)))
    scale_arr = jnp.asarray(scale, jnp.float32).reshape(1)

    out = pl.pallas_call(
        _decoder_step_kernel,
        out_shape=jax.ShapeDtypeStruct((3, n_pad), jnp.float32),
        grid=(n_pad // tn,),
        in_specs=[
            pl.BlockSpec(memory_space=pltpu.MemorySpace.SMEM),   # scale
            pl.BlockSpec((f_in, tn), lambda i: (0, i)),          # X^T  (bf16)
            pl.BlockSpec((3, tn), lambda i: (0, i)),             # base^T (f32)
            pl.BlockSpec((h, f_in), lambda i: (0, 0)),           # We1^T (bf16)
            pl.BlockSpec((h, 1), lambda i: (0, 0)),              # be1' (f32)
            pl.BlockSpec((h, h), lambda i: (0, 0)),              # We2^T (bf16)
            pl.BlockSpec((h, 1), lambda i: (0, 0)),              # be2  (f32)
            pl.BlockSpec((3, h), lambda i: (0, 0)),              # Wd^T (bf16)
            pl.BlockSpec((3, 1), lambda i: (0, 0)),              # bd   (f32)
        ],
        out_specs=pl.BlockSpec((3, tn), lambda i: (0, i)),
        compiler_params=pltpu.CompilerParams(
            dimension_semantics=("parallel",)),
    )(scale_arr, x_p, b_p, we1_t, be1_c, we2_t, be2_c, wd_t, bd_c)
    return out[:, :n]


# ----------------------------------------------------------------------------
# Full forward (training branch of VAEDecoder.forward)
# ----------------------------------------------------------------------------
def vae_decoder_forward(sample_data_full, latent, params, accel_scale=0.01, *,
                        num_frames, skip_frames, tn_max=2048):
    bs, _, num_cars, _, _ = sample_data_full.shape
    hidden = params["we1"].shape[1]
    # _decode_latent(latent) is overwritten by torch.ones_like in the reference,
    # so the latent MLP is dead; its all-ones output is folded into be1 below.
    del latent

    T = num_frames // skip_frames
    sample_data = sample_data_full[:, ::skip_frames]          # (bs, T, cars, in_c, 3)
    velocities = sample_data[:, 1:, :, 0] - sample_data[:, :-1, :, 0]

    # Per-step inputs use raw (unstrided) frame indices i = 1 .. T-2, exactly
    # mirroring the PyTorch list comprehension over x['sample_data'].
    pos = sample_data_full[:, 1:T - 1, :, 0]                  # (bs, T-2, cars, 3)
    vel = pos - sample_data_full[:, 0:T - 2, :, 0]            # (bs, T-2, cars, 3)

    n = bs * (T - 2) * num_cars
    # Transposed, lane-dense layout: rows go on the lane axis.
    x_t = jnp.concatenate([pos, vel], axis=-1).reshape(n, 6).T.astype(jnp.bfloat16)
    base_t = (sample_data[:, 1:-1, :, 0] + velocities[:, :-1]).reshape(n, 3).T

    # Fold the all-ones behaviour embedding into the first-layer bias.
    we1 = params["we1"]                                       # (6+H, H)
    be1_fold = (params["be1"].reshape(-1) + we1[6:].sum(axis=0)).reshape(hidden, 1)
    we1_t = we1[:6].T.astype(jnp.bfloat16)                    # (H, 6)
    we2_t = params["we2"].T.astype(jnp.bfloat16)              # (H, H)
    be2_c = params["be2"].reshape(hidden, 1)
    wd_t = params["wd"].T.astype(jnp.bfloat16)                # (3, H)
    bd_c = params["bd"].reshape(3, 1)

    scale = jnp.asarray(accel_scale, jnp.float32) * skip_frames
    tail_t = fused_state_mlp_t(x_t, base_t, we1_t, be1_fold, we2_t, be2_c,
                               wd_t, bd_c, scale, tn_max=tn_max)      # (3, n)
    tail = tail_t.T.reshape(bs, T - 2, num_cars, 3)

    return jnp.concatenate([sample_data[:, 0:2, :, 0], tail], axis=1)  # (bs, T, cars, 3)


# Pure-JAX reference of the same math (original, un-folded, f32 formulation).
def _reference(sample_data_full, latent, params, num_frames, skip_frames, accel_scale):
    bs, _, num_cars, _, _ = sample_data_full.shape
    hidden = params["we1"].shape[1]
    decoded_latent = jnp.ones((bs, num_cars, hidden), jnp.float32)
    T = num_frames // skip_frames
    sample_data = sample_data_full[:, ::skip_frames]
    velocities = sample_data[:, 1:, :, 0] - sample_data[:, :-1, :, 0]
    pos = sample_data_full[:, 1:T - 1, :, 0]
    vel = sample_data_full[:, 1:T - 1, :, 0] - sample_data_full[:, 0:T - 2, :, 0]
    emb = jnp.broadcast_to(decoded_latent[:, None], (bs, T - 2, num_cars, hidden))
    feat = jnp.concatenate([pos, vel, emb], axis=-1)
    h = _leaky_relu(feat @ params["we1"] + params["be1"])
    h = _leaky_relu(h @ params["we2"] + params["be2"])
    a = jnp.tanh(h @ params["wd"] + params["bd"])
    accel = a * accel_scale * skip_frames
    tail = sample_data[:, 1:-1, :, 0] + velocities[:, :-1] + accel
    return jnp.concatenate([sample_data[:, 0:2, :, 0], tail], axis=1)


def _init_linear(key, fan_in, fan_out):
    kw, kb = jax.random.split(key)
    bound = 1.0 / jnp.sqrt(fan_in)
    w = jax.random.uniform(kw, (fan_in, fan_out), jnp.float32, -bound, bound)
    b = jax.random.uniform(kb, (1, fan_out), jnp.float32, -bound, bound)
    return w, b


if __name__ == "__main__":
    # Small deterministic config (tn_max=128 forces a multi-step grid on the
    # toy size to exercise the pipelined path; production default is 2048).
    bs, num_frames, num_cars, in_c, state_dim = 2, 32, 8, 2, 3
    hidden_dim, latent_dim, skip_frames, accel_scale = 32, 2, 2, 0.01

    key = jax.random.PRNGKey(0)
    k_x, k_lat, k1, k2, k3, k4, k5 = jax.random.split(key, 7)

    sample_data = jax.random.normal(
        k_x, (bs, num_frames, num_cars, in_c, state_dim), jnp.float32)
    latent = jax.random.normal(k_lat, (bs, num_cars, latent_dim), jnp.float32)

    wl1, bl1 = _init_linear(k1, latent_dim, hidden_dim)      # dead in forward
    wl2, bl2 = _init_linear(k2, hidden_dim, hidden_dim)      # dead in forward
    we1, be1 = _init_linear(k3, 6 + hidden_dim, hidden_dim)
    we2, be2 = _init_linear(k4, hidden_dim, hidden_dim)
    wd, bd = _init_linear(k5, hidden_dim, 3)
    params = dict(wl1=wl1, bl1=bl1, wl2=wl2, bl2=bl2,
                  we1=we1, be1=be1, we2=we2, be2=be2, wd=wd, bd=bd)

    fwd = jax.jit(functools.partial(vae_decoder_forward,
                                    num_frames=num_frames,
                                    skip_frames=skip_frames,
                                    tn_max=128))
    out = jax.block_until_ready(fwd(sample_data, latent, params,
                                    jnp.float32(accel_scale)))

    ref = _reference(sample_data, latent, params,
                     num_frames, skip_frames, accel_scale)
    T = num_frames // skip_frames
    assert out.shape == (bs, T, num_cars, state_dim), out.shape
    err = float(jnp.max(jnp.abs(out - ref)))
    assert jnp.allclose(out, ref, atol=2e-3, rtol=2e-3), f"mismatch, max err={err}"

    print("KERNEL_OK")
</pallas_src>

<mosaic_0001>
module attributes {stable_mosaic.version = 11 : i64} {
  func.func @_decoder_step_kernel(%arg0: i32, %arg1: memref<1xf32, #tpu.memory_space<smem>>, %arg2: memref<6x128xbf16, #tpu.memory_space<vmem>>, %arg3: memref<3x128xf32, #tpu.memory_space<vmem>>, %arg4: memref<32x6xbf16, #tpu.memory_space<vmem>>, %arg5: memref<32x1xf32, #tpu.memory_space<vmem>>, %arg6: memref<32x32xbf16, #tpu.memory_space<vmem>>, %arg7: memref<32x1xf32, #tpu.memory_space<vmem>>, %arg8: memref<3x32xbf16, #tpu.memory_space<vmem>>, %arg9: memref<3x1xf32, #tpu.memory_space<vmem>>, %arg10: memref<3x128xf32, #tpu.memory_space<vmem>>) attributes {dimension_semantics = [#tpu.dimension_semantics<parallel>], iteration_bounds = array<i64: 2>, scalar_prefetch = 0 : i64, scratch_operands = 0 : i64, tpu.core_type = #tpu.core_type<tc>, window_params = [{transform_indices = @transform_0, window_bounds = array<i64: 1>}, {transform_indices = @transform_1, window_bounds = array<i64: 6, 128>}, {transform_indices = @transform_2, window_bounds = array<i64: 3, 128>}, {pipeline_mode = #tpu.pipeline_mode<synchronous>, transform_indices = @transform_3, window_bounds = array<i64: 32, 6>}, {pipeline_mode = #tpu.pipeline_mode<synchronous>, transform_indices = @transform_4, window_bounds = array<i64: 32, 1>}, {pipeline_mode = #tpu.pipeline_mode<synchronous>, transform_indices = @transform_5, window_bounds = array<i64: 32, 32>}, {pipeline_mode = #tpu.pipeline_mode<synchronous>, transform_indices = @transform_6, window_bounds = array<i64: 32, 1>}, {pipeline_mode = #tpu.pipeline_mode<synchronous>, transform_indices = @transform_7, window_bounds = array<i64: 3, 32>}, {pipeline_mode = #tpu.pipeline_mode<synchronous>, transform_indices = @transform_8, window_bounds = array<i64: 3, 1>}, {transform_indices = @transform_9, window_bounds = array<i64: 3, 128>}]} {
    %c0 = arith.constant 0 : index
    %0 = memref.load %arg1[%c0] : memref<1xf32, #tpu.memory_space<smem>>
    %c0_0 = arith.constant 0 : index
    %c0_1 = arith.constant 0 : index
    %1 = vector.load %arg2[%c0_0, %c0_1] : memref<6x128xbf16, #tpu.memory_space<vmem>>, vector<6x128xbf16>
    %c0_2 = arith.constant 0 : index
    %c0_3 = arith.constant 0 : index
    %2 = vector.load %arg4[%c0_2, %c0_3] : memref<32x6xbf16, #tpu.memory_space<vmem>>, vector<32x6xbf16>
    %cst = arith.constant dense<0.000000e+00> : vector<32x128xf32>
    %3 = tpu.matmul %2, %1, %cst {dimension_numbers = #tpu.dot_dimension_numbers<[1], [0], [0], [1], [0, 0, 1, 1], [], []>} : vector<32x6xbf16>, vector<6x128xbf16>, vector<32x128xf32> -> vector<32x128xf32>
    %c0_4 = arith.constant 0 : index
    %c0_5 = arith.constant 0 : index
    %4 = vector.load %arg5[%c0_4, %c0_5] : memref<32x1xf32, #tpu.memory_space<vmem>>, vector<32x1xf32>
    %5 = vector.broadcast %4 : vector<32x1xf32> to vector<32x128xf32>
    %6 = arith.addf %3, %5 : vector<32x128xf32>
    %cst_6 = arith.constant 0.000000e+00 : f32
    %7 = vector.broadcast %cst_6 : f32 to vector<32x128xf32>
    %8 = arith.cmpf ogt, %6, %7 : vector<32x128xf32>
    %cst_7 = arith.constant 0.00999999977 : f32
    %9 = vector.broadcast %cst_7 : f32 to vector<32x128xf32>
    %10 = arith.mulf %9, %6 : vector<32x128xf32>
    %11 = arith.select %8, %6, %10 : vector<32x128xi1>, vector<32x128xf32>
    %c0_8 = arith.constant 0 : index
    %c0_9 = arith.constant 0 : index
    %12 = vector.load %arg6[%c0_8, %c0_9] : memref<32x32xbf16, #tpu.memory_space<vmem>>, vector<32x32xbf16>
    %13 = arith.truncf %11 : vector<32x128xf32> to vector<32x128xbf16>
    %cst_10 = arith.constant dense<0.000000e+00> : vector<32x128xf32>
    %14 = tpu.matmul %12, %13, %cst_10 {dimension_numbers = #tpu.dot_dimension_numbers<[1], [0], [0], [1], [0, 0, 1, 1], [], []>} : vector<32x32xbf16>, vector<32x128xbf16>, vector<32x128xf32> -> vector<32x128xf32>
    %c0_11 = arith.constant 0 : index
    %c0_12 = arith.constant 0 : index
    %15 = vector.load %arg7[%c0_11, %c0_12] : memref<32x1xf32, #tpu.memory_space<vmem>>, vector<32x1xf32>
    %16 = vector.broadcast %15 : vector<32x1xf32> to vector<32x128xf32>
    %17 = arith.addf %14, %16 : vector<32x128xf32>
    %cst_13 = arith.constant 0.000000e+00 : f32
    %18 = vector.broadcast %cst_13 : f32 to vector<32x128xf32>
    %19 = arith.cmpf ogt, %17, %18 : vector<32x128xf32>
    %cst_14 = arith.constant 0.00999999977 : f32
    %20 = vector.broadcast %cst_14 : f32 to vector<32x128xf32>
    %21 = arith.mulf %20, %17 : vector<32x128xf32>
    %22 = arith.select %19, %17, %21 : vector<32x128xi1>, vector<32x128xf32>
    %c0_15 = arith.constant 0 : index
    %c0_16 = arith.constant 0 : index
    %23 = vector.load %arg8[%c0_15, %c0_16] : memref<3x32xbf16, #tpu.memory_space<vmem>>, vector<3x32xbf16>
    %24 = arith.truncf %22 : vector<32x128xf32> to vector<32x128xbf16>
    %cst_17 = arith.constant dense<0.000000e+00> : vector<3x128xf32>
    %25 = tpu.matmul %23, %24, %cst_17 {dimension_numbers = #tpu.dot_dimension_numbers<[1], [0], [0], [1], [0, 0, 1, 1], [], []>} : vector<3x32xbf16>, vector<32x128xbf16>, vector<3x128xf32> -> vector<3x128xf32>
    %c0_18 = arith.constant 0 : index
    %c0_19 = arith.constant 0 : index
    %26 = vector.load %arg9[%c0_18, %c0_19] : memref<3x1xf32, #tpu.memory_space<vmem>>, vector<3x1xf32>
    %27 = vector.broadcast %26 : vector<3x1xf32> to vector<3x128xf32>
    %28 = arith.addf %25, %27 : vector<3x128xf32>
    %29 = math.tanh %28 : vector<3x128xf32>
    %c0_20 = arith.constant 0 : index
    %c0_21 = arith.constant 0 : index
    %30 = vector.load %arg3[%c0_20, %c0_21] : memref<3x128xf32, #tpu.memory_space<vmem>>, vector<3x128xf32>
    %31 = vector.broadcast %0 : f32 to vector<3x128xf32>
    %32 = arith.mulf %31, %29 : vector<3x128xf32>
    %33 = arith.addf %30, %32 : vector<3x128xf32>
    %c0_22 = arith.constant 0 : index
    %c0_23 = arith.constant 0 : index
    %34 = vector.load %arg10[%c0_22, %c0_23] : memref<3x128xf32, #tpu.memory_space<vmem>>, vector<3x128xf32>
    tpu.vector_store %arg10[%c0_22, %c0_23], %33 {strides = array<i32>} : memref<3x128xf32, #tpu.memory_space<vmem>>, vector<3x128xf32>,
    return
  }
  func.func @transform_0(%arg0: i32) -> i32 {
    %c0_i32 = arith.constant 0 : i32
    %c0_i32_0 = arith.constant 0 : i32
    return %c0_i32 : i32
  }
  func.func @transform_1(%arg0: i32) -> (i32, i32) {
    %c0_i32 = arith.constant 0 : i32
    %c0_i32_0 = arith.constant 0 : i32
    return %c0_i32, %arg0 : i32, i32
  }
  func.func @transform_2(%arg0: i32) -> (i32, i32) {
    %c0_i32 = arith.constant 0 : i32
    %c0_i32_0 = arith.constant 0 : i32
    return %c0_i32, %arg0 : i32, i32
  }
  func.func @transform_3(%arg0: i32) -> (i32, i32) {
    %c0_i32 = arith.constant 0 : i32
    %c0_i32_0 = arith.constant 0 : i32
    %c0_i32_1 = arith.constant 0 : i32
    return %c0_i32, %c0_i32_0 : i32, i32
  }
  func.func @transform_4(%arg0: i32) -> (i32, i32) {
    %c0_i32 = arith.constant 0 : i32
    %c0_i32_0 = arith.constant 0 : i32
    %c0_i32_1 = arith.constant 0 : i32
    return %c0_i32, %c0_i32_0 : i32, i32
  }
  func.func @transform_5(%arg0: i32) -> (i32, i32) {
    %c0_i32 = arith.constant 0 : i32
    %c0_i32_0 = arith.constant 0 : i32
    %c0_i32_1 = arith.constant 0 : i32
    return %c0_i32, %c0_i32_0 : i32, i32
  }
  func.func @transform_6(%arg0: i32) -> (i32, i32) {
    %c0_i32 = arith.constant 0 : i32
    %c0_i32_0 = arith.constant 0 : i32
    %c0_i32_1 = arith.constant 0 : i32
    return %c0_i32, %c0_i32_0 : i32, i32
  }
  func.func @transform_7(%arg0: i32) -> (i32, i32) {
    %c0_i32 = arith.constant 0 : i32
    %c0_i32_0 = arith.constant 0 : i32
    %c0_i32_1 = arith.constant 0 : i32
    return %c0_i32, %c0_i32_0 : i32, i32
  }
  func.func @transform_8(%arg0: i32) -> (i32, i32) {
    %c0_i32 = arith.constant 0 : i32
    %c0_i32_0 = arith.constant 0 : i32
    %c0_i32_1 = arith.constant 0 : i32
    return %c0_i32, %c0_i32_0 : i32, i32
  }
  func.func @transform_9(%arg0: i32) -> (i32, i32) {
    %c0_i32 = arith.constant 0 : i32
    %c0_i32_0 = arith.constant 0 : i32
    return %c0_i32, %arg0 : i32, i32
  }
}

</mosaic_0001>

<llo_original>
// kernel: vae_decoder_forward.1
$region0: #{vae_decoder_forward.1}
  #allocation0 [shape = 'u32[]', space=smem, size = 0x4, offset = 0x4, fixed_abs, tag = 'smem constant byte address 0x4 - core index']
  #allocation1 [shape = 'u32[144,128]{1,0:T(1,128)}', space=vmem, size = 0x12000, scoped, tag = 'internal scratch']
  #allocation2 [shape = 'f32[1]{0:T(128)S(6)}', space=smem, size = 0x200, scoped, tag = 'scoped memory for vae_decoder_forward.1']
  %s0 = inlined_call_operand.<no memory space> [shape: f32[1], index: 0, kind: input, shape index: {}]
  %s1 = inlined_call_operand.vmem [shape: bf16[6,256], index: 1, kind: input, shape index: {}]
  %s2 = inlined_call_operand.vmem [shape: f32[3,256], index: 2, kind: input, shape index: {}]
  %s3 = inlined_call_operand.vmem [shape: bf16[32,6], index: 3, kind: input, shape index: {}]
  %s4 = inlined_call_operand.vmem [shape: f32[32,1], index: 4, kind: input, shape index: {}]
  %s5 = inlined_call_operand.vmem [shape: bf16[32,32], index: 5, kind: input, shape index: {}]
  %s6 = inlined_call_operand.vmem [shape: f32[32,1], index: 6, kind: input, shape index: {}]
  %s7 = inlined_call_operand.vmem [shape: bf16[3,32], index: 7, kind: input, shape index: {}]
  %s8 = inlined_call_operand.vmem [shape: f32[3,1], index: 8, kind: input, shape index: {}]
  %s9 = inlined_call_operand.vmem [shape: f32[3,256], index: 9, kind: output, shape index: {}]
  %s10 = sld [smem:[#allocation0]]
  $region69: #{vae_decoder_forward.1} parent=0
    _
  %s12 = ssub.s32 1, %s10
  %s13 = scalar_select 0, %s12, %s10
  %14 = sst [smem:[#allocation2]] %s0
  loop: start=0, step=1, limit=4
  $region2: #{vae_decoder_forward.1} parent=0 // loop_pre_header
    _
  $region3: #{vae_decoder_forward.1} parent=0 // loop_header
    %s16 = sphi 0, %s20
    %p17 = scmp.ge.s32.totalorder %s16, 4
    %s24 = sphi 0, %s24
    %s26 = sphi 0, %s24
    %s27 = sphi 0, %s26
    %s41 = sphi 0, %s27
    %s47 = sphi 0, %s49
    %s50 = sphi 0, %s47
    %s51 = sphi 0, %s50
    %s67 = sphi 0, %s51
    %s73 = sphi 0, %s75
    %s76 = sphi 0, %s73
    %s77 = sphi 0, %s76
    %s93 = sphi 0, %s77
    %s97 = sphi 0, %s97
    %s99 = sphi 0, %s97
    %s100 = sphi 0, %s99
    %s114 = sphi 0, %s100
    %s118 = sphi 0, %s118
    %s120 = sphi 0, %s118
    %s121 = sphi 0, %s120
    %s135 = sphi 0, %s121
    %s139 = sphi 0, %s139
    %s141 = sphi 0, %s139
    %s142 = sphi 0, %s141
    %s156 = sphi 0, %s142
    %s160 = sphi 0, %s160
    %s162 = sphi 0, %s160
    %s163 = sphi 0, %s162
    %s177 = sphi 0, %s163
    %s181 = sphi 0, %s181
    %s183 = sphi 0, %s181
    %s184 = sphi 0, %s183
    %s198 = sphi 0, %s184
    %s202 = sphi 0, %s202
    %s204 = sphi 0, %s202
    %s205 = sphi 0, %s204
    %s219 = sphi 0, %s205
    %s225 = sphi 0, %s227
    %s228 = sphi 0, %s225
    %s229 = sphi 0, %s228
    %s245 = sphi 0, %s229
  $region4: #{vae_decoder_forward.1} parent=0 // loop_header_branch
    %19 = sbr.rel (%p17) target = $region8
  $region5: #{vae_decoder_forward.1} parent=0 // loop_body
    %s21 = ssub.s32 %s16, 1
    %s22 = ssub.s32 %s16, 2
    %s23 = sadd.s32 %s16, 1
    %s25 = sadd.s32 %s24, 1
    %p28 = scmp.eq.s32.totalorder %s16, 1
    %p29 = scmp.ne.s32.totalorder %s24, %s26
    %p30 = scmp.eq.s32.totalorder %s16, 0
    %p31 = por %p29, %p30
    %p32 = scmp.ne.s32.totalorder %s24, %s26
    %p33 = scmp.eq.s32.totalorder %s21, 1
    %p34 = por %p32, %p33
    %p35 = scmp.ne.s32.totalorder %s26, %s27
    %p36 = scmp.eq.s32.totalorder %s21, 0
    %p37 = por %p35, %p36
    %p38 = scmp.ne.s32.totalorder %s26, %s27
    %p39 = scmp.eq.s32.totalorder %s22, 1
    %p40 = por %p38, %p39
    %p42 = scmp.ne.s32.totalorder %s27, %s41
    %p43 = scmp.eq.s32.totalorder %s22, 0
    %p44 = por %p42, %p43
    %s45 = ssub.s32 %s16, %s23
    %p46 = scmp.eq.s32.totalorder %s45, 0
    %s48 = sadd.s32 %s47, 1
    %s49 = scalar_select %p46, %s47, %s48
    %p52 = pneg %p46
    %p53 = scmp.eq.s32.totalorder %s16, 1
    %p54 = por %p52, %p53
    %p55 = scmp.ne.s32.totalorder %s47, %s50
    %p56 = scmp.eq.s32.totalorder %s16, 0
    %p57 = por %p55, %p56
    %p58 = scmp.ne.s32.totalorder %s47, %s50
    %p59 = scmp.eq.s32.totalorder %s21, 1
    %p60 = por %p58, %p59
    %p61 = scmp.ne.s32.totalorder %s50, %s51
    %p62 = scmp.eq.s32.totalorder %s21, 0
    %p63 = por %p61, %p62
    %p64 = scmp.ne.s32.totalorder %s50, %s51
    %p65 = scmp.eq.s32.totalorder %s22, 1
    %p66 = por %p64, %p65
    %p68 = scmp.ne.s32.totalorder %s51, %s67
    %p69 = scmp.eq.s32.totalorder %s22, 0
    %p70 = por %p68, %p69
    %s71 = ssub.s32 %s16, %s23
    %p72 = scmp.eq.s32.totalorder %s71, 0
    %s74 = sadd.s32 %s73, 1
    %s75 = scalar_select %p72, %s73, %s74
    %p78 = pneg %p72
    %p79 = scmp.eq.s32.totalorder %s16, 1
    %p80 = por %p78, %p79
    %p81 = scmp.ne.s32.totalorder %s73, %s76
    %p82 = scmp.eq.s32.totalorder %s16, 0
    %p83 = por %p81, %p82
    %p84 = scmp.ne.s32.totalorder %s73, %s76
    %p85 = scmp.eq.s32.totalorder %s21, 1
    %p86 = por %p84, %p85
    %p87 = scmp.ne.s32.totalorder %s76, %s77
    %p88 = scmp.eq.s32.totalorder %s21, 0
    %p89 = por %p87, %p88
    %p90 = scmp.ne.s32.totalorder %s76, %s77
    %p91 = scmp.eq.s32.totalorder %s22, 1
    %p92 = por %p90, %p91
    %p94 = scmp.ne.s32.totalorder %s77, %s93
    %p95 = scmp.eq.s32.totalorder %s22, 0
    %p96 = por %p94, %p95
    %s98 = sadd.s32 %s97, 1
    %p101 = scmp.eq.s32.totalorder %s16, 1
    %p102 = scmp.ne.s32.totalorder %s97, %s99
    %p103 = scmp.eq.s32.totalorder %s16, 0
    %p104 = por %p102, %p103
    %p105 = scmp.ne.s32.totalorder %s97, %s99
    %p106 = scmp.eq.s32.totalorder %s21, 1
    %p107 = por %p105, %p106
    %p108 = scmp.ne.s32.totalorder %s99, %s100
    %p109 = scmp.eq.s32.totalorder %s21, 0
    %p110 = por %p108, %p109
    %p111 = scmp.ne.s32.totalorder %s99, %s100
    %p112 = scmp.eq.s32.totalorder %s22, 1
    %p113 = por %p111, %p112
    %p115 = scmp.ne.s32.totalorder %s100, %s114
    %p116 = scmp.eq.s32.totalorder %s22, 0
    %p117 = por %p115, %p116
    %s119 = sadd.s32 %s118, 1
    %p122 = scmp.eq.s32.totalorder %s16, 1
    %p123 = scmp.ne.s32.totalorder %s118, %s120
    %p124 = scmp.eq.s32.totalorder %s16, 0
    %p125 = por %p123, %p124
    %p126 = scmp.ne.s32.totalorder %s118, %s120
    %p127 = scmp.eq.s32.totalorder %s21, 1
    %p128 = por %p126, %p127
    %p129 = scmp.ne.s32.totalorder %s120, %s121
    %p130 = scmp.eq.s32.totalorder %s21, 0
    %p131 = por %p129, %p130
    %p132 = scmp.ne.s32.totalorder %s120, %s121
    %p133 = scmp.eq.s32.totalorder %s22, 1
    %p134 = por %p132, %p133
    %p136 = scmp.ne.s32.totalorder %s121, %s135
    %p137 = scmp.eq.s32.totalorder %s22, 0
    %p138 = por %p136, %p137
    %s140 = sadd.s32 %s139, 1
    %p143 = scmp.eq.s32.totalorder %s16, 1
    %p144 = scmp.ne.s32.totalorder %s139, %s141
    %p145 = scmp.eq.s32.totalorder %s16, 0
    %p146 = por %p144, %p145
    %p147 = scmp.ne.s32.totalorder %s139, %s141
    %p148 = scmp.eq.s32.totalorder %s21, 1
    %p149 = por %p147, %p148
    %p150 = scmp.ne.s32.totalorder %s141, %s142
    %p151 = scmp.eq.s32.totalorder %s21, 0
    %p152 = por %p150, %p151
    %p153 = scmp.ne.s32.totalorder %s141, %s142
    %p154 = scmp.eq.s32.totalorder %s22, 1
    %p155 = por %p153, %p154
    %p157 = scmp.ne.s32.totalorder %s142, %s156
    %p158 = scmp.eq.s32.totalorder %s22, 0
    %p159 = por %p157, %p158
    %s161 = sadd.s32 %s160, 1
    %p164 = scmp.eq.s32.totalorder %s16, 1
    %p165 = scmp.ne.s32.totalorder %s160, %s162
    %p166 = scmp.eq.s32.totalorder %s16, 0
    %p167 = por %p165, %p166
    %p168 = scmp.ne.s32.totalorder %s160, %s162
    %p169 = scmp.eq.s32.totalorder %s21, 1
    %p170 = por %p168, %p169
    %p171 = scmp.ne.s32.totalorder %s162, %s163
    %p172 = scmp.eq.s32.totalorder %s21, 0
    %p173 = por %p171, %p172
    %p174 = scmp.ne.s32.totalorder %s162, %s163
    %p175 = scmp.eq.s32.totalorder %s22, 1
    %p176 = por %p174, %p175
    %p178 = scmp.ne.s32.totalorder %s163, %s177
    %p179 = scmp.eq.s32.totalorder %s22, 0
    %p180 = por %p178, %p179
    %s182 = sadd.s32 %s181, 1
    %p185 = scmp.eq.s32.totalorder %s16, 1
    %p186 = scmp.ne.s32.totalorder %s181, %s183
    %p187 = scmp.eq.s32.totalorder %s16, 0
    %p188 = por %p186, %p187
    %p189 = scmp.ne.s32.totalorder %s181, %s183
    %p190 = scmp.eq.s32.totalorder %s21, 1
    %p191 = por %p189, %p190
    %p192 = scmp.ne.s32.totalorder %s183, %s184
    %p193 = scmp.eq.s32.totalorder %s21, 0
    %p194 = por %p192, %p193
    %p195 = scmp.ne.s32.totalorder %s183, %s184
    %p196 = scmp.eq.s32.totalorder %s22, 1
    %p197 = por %p195, %p196
    %p199 = scmp.ne.s32.totalorder %s184, %s198
    %p200 = scmp.eq.s32.totalorder %s22, 0
    %p201 = por %p199, %p200
    %s203 = sadd.s32 %s202, 1
    %p206 = scmp.eq.s32.totalorder %s16, 1
    %p207 = scmp.ne.s32.totalorder %s202, %s204
    %p208 = scmp.eq.s32.totalorder %s16, 0
    %p209 = por %p207, %p208
    %p210 = scmp.ne.s32.totalorder %s202, %s204
    %p211 = scmp.eq.s32.totalorder %s21, 1
    %p212 = por %p210, %p211
    %p213 = scmp.ne.s32.totalorder %s204, %s205
    %p214 = scmp.eq.s32.totalorder %s21, 0
    %p215 = por %p213, %p214
    %p216 = scmp.ne.s32.totalorder %s204, %s205
    %p217 = scmp.eq.s32.totalorder %s22, 1
    %p218 = por %p216, %p217
    %p220 = scmp.ne.s32.totalorder %s205, %s219
    %p221 = scmp.eq.s32.totalorder %s22, 0
    %p222 = por %p220, %p221
    %s223 = ssub.s32 %s16, %s23
    %p224 = scmp.eq.s32.totalorder %s223, 0
    %s226 = sadd.s32 %s225, 1
    %s227 = scalar_select %p224, %s225, %s226
    %p230 = pneg %p224
    %p231 = scmp.eq.s32.totalorder %s16, 1
    %p232 = por %p230, %p231
    %p233 = scmp.ne.s32.totalorder %s225, %s228
    %p234 = scmp.eq.s32.totalorder %s16, 0
    %p235 = por %p233, %p234
    %p236 = scmp.ne.s32.totalorder %s225, %s228
    %p237 = scmp.eq.s32.totalorder %s21, 1
    %p238 = por %p236, %p237
    %p239 = scmp.ne.s32.totalorder %s228, %s229
    %p240 = scmp.eq.s32.totalorder %s21, 0
    %p241 = por %p239, %p240
    %p242 = scmp.ne.s32.totalorder %s228, %s229
    %p243 = scmp.eq.s32.totalorder %s22, 1
    %p244 = por %p242, %p243
    %p246 = scmp.ne.s32.totalorder %s229, %s245
    %p247 = scmp.eq.s32.totalorder %s22, 0
    %p248 = por %p246, %p247
    %p249 = scmp.le.s32.totalorder 1, %s16
    %p250 = scmp.lt.s32.totalorder %s16, 3
    %p251 = pnand %p249, %p250
    %p252 = pneg %p251
    // Predicated region
    $region9: #{vae_decoder_forward.1} parent=5 // pred_check
      _
    $region10: #{vae_decoder_forward.1} parent=5 // pred_check_branch
      %254 = sbr.rel (%p251) target = $region12
    $region11: #{vae_decoder_forward.1} parent=5 // pred_region
      %s255 = ssub.s32 %s16, 1
      // Predicated region
      $region13: #{vae_decoder_forward.1} parent=11 // pred_check
        %p256 = pneg %p37
      $region14: #{vae_decoder_forward.1} parent=11 // pred_check_branch
        %258 = sbr.rel (%p256) target = $region16
      $region15: #{vae_decoder_forward.1} parent=11 // pred_region
        _
      $region16: #{vae_decoder_forward.1} parent=11 // pred_fallthru
        _
      // Predicated region
      $region17: #{vae_decoder_forward.1} parent=11 // pred_check
        %p259 = pneg %p110
      $region18: #{vae_decoder_forward.1} parent=11 // pred_check_branch
        %261 = sbr.rel (%p259) target = $region20
      $region19: #{vae_decoder_forward.1} parent=11 // pred_region
        _
      $region20: #{vae_decoder_forward.1} parent=11 // pred_fallthru
        _
      // Predicated region
      $region21: #{vae_decoder_forward.1} parent=11 // pred_check
        %p262 = pneg %p131
      $region22: #{vae_decoder_forward.1} parent=11 // pred_check_branch
        %264 = sbr.rel (%p262) target = $region24
      $region23: #{vae_decoder_forward.1} parent=11 // pred_region
        _
      $region24: #{vae_decoder_forward.1} parent=11 // pred_fallthru
        _
      // Predicated region
      $region25: #{vae_decoder_forward.1} parent=11 // pred_check
        %p265 = pneg %p152
      $region26: #{vae_decoder_forward.1} parent=11 // pred_check_branch
        %267 = sbr.rel (%p265) target = $region28
      $region27: #{vae_decoder_forward.1} parent=11 // pred_region
        _
      $region28: #{vae_decoder_forward.1} parent=11 // pred_fallthru
        _
      // Predicated region
      $region29: #{vae_decoder_forward.1} parent=11 // pred_check
        %p268 = pneg %p173
      $region30: #{vae_decoder_forward.1} parent=11 // pred_check_branch
        %270 = sbr.rel (%p268) target = $region32
      $region31: #{vae_decoder_forward.1} parent=11 // pred_region
        _
      $region32: #{vae_decoder_forward.1} parent=11 // pred_fallthru
        _
      // Predicated region
      $region33: #{vae_decoder_forward.1} parent=11 // pred_check
        %p271 = pneg %p194
      $region34: #{vae_decoder_forward.1} parent=11 // pred_check_branch
        %273 = sbr.rel (%p271) target = $region36
      $region35: #{vae_decoder_forward.1} parent=11 // pred_region
        _
      $region36: #{vae_decoder_forward.1} parent=11 // pred_fallthru
        _
      // Predicated region
      $region37: #{vae_decoder_forward.1} parent=11 // pred_check
        %p274 = pneg %p215
      $region38: #{vae_decoder_forward.1} parent=11 // pred_check_branch
        %276 = sbr.rel (%p274) target = $region40
      $region39: #{vae_decoder_forward.1} parent=11 // pred_region
        _
      $region40: #{vae_decoder_forward.1} parent=11 // pred_fallthru
        _
    $region12: #{vae_decoder_forward.1} parent=5 // pred_fallthru
      _
    %p277 = scmp.lt.s32.totalorder %s16, 2
    // Predicated region
    $region41: #{vae_decoder_forward.1} parent=5 // pred_check
      %p278 = pneg %p277
    $region42: #{vae_decoder_forward.1} parent=5 // pred_check_branch
      %280 = sbr.rel (%p278) target = $region44
    $region43: #{vae_decoder_forward.1} parent=5 // pred_region
      // Predicated region
      $region45: #{vae_decoder_forward.1} parent=43 // pred_check
        %p281 = pneg %p57
      $region46: #{vae_decoder_forward.1} parent=43 // pred_check_branch
        %283 = sbr.rel (%p281) target = $region48
      $region47: #{vae_decoder_forward.1} parent=43 // pred_region
        %p284 = scmp.lt.s32.totalorder %s16, 1
        %s285 = scalar_select %p284, %s16, 1
        %s286 = smul.addr %s285, 4
        %s287 = scalar_lea.vmem %s1, %s286
      $region48: #{vae_decoder_forward.1} parent=43 // pred_fallthru
        _
      // Predicated region
      $region49: #{vae_decoder_forward.1} parent=43 // pred_check
        %p288 = pneg %p83
      $region50: #{vae_decoder_forward.1} parent=43 // pred_check_branch
        %290 = sbr.rel (%p288) target = $region52
      $region51: #{vae_decoder_forward.1} parent=43 // pred_region
        %p291 = scmp.lt.s32.totalorder %s16, 1
        %s292 = scalar_select %p291, %s16, 1
        %s293 = smul.addr %s292, 4
        %s294 = scalar_lea.vmem %s2, %s293
      $region52: #{vae_decoder_forward.1} parent=43 // pred_fallthru
        _
    $region44: #{vae_decoder_forward.1} parent=5 // pred_fallthru
      _
    %p295 = scmp.le.s32.totalorder 1, %s16
    %p296 = scmp.lt.s32.totalorder %s16, 3
    %p297 = pnand %p295, %p296
    %p298 = pneg %p297
    // Predicated region
    $region53: #{vae_decoder_forward.1} parent=5 // pred_check
      _
    $region54: #{vae_decoder_forward.1} parent=5 // pred_check_branch
      %300 = sbr.rel (%p297) target = $region56
    $region55: #{vae_decoder_forward.1} parent=5 // pred_region
      %s301 = ssub.s32 %s16, 1
      %p302 = pneg %p37
      %p303 = pneg %p34
      %p304 = scmp.lt.s32.totalorder %s21, 1
      %s305 = scalar_select %p304, %s21, 1
      %s306 = smul.addr %s305, 4
      %s307 = scalar_lea.vmem %s1, %s306
      %p308 = pneg %p63
      %p309 = pneg %p60
      %p310 = scmp.lt.s32.totalorder %s21, 1
      %s311 = scalar_select %p310, %s21, 1
      %s312 = smul.addr %s311, 4
      %s313 = scalar_lea.vmem %s2, %s312
      %p314 = pneg %p89
      %p315 = pneg %p86
      %p316 = pneg %p110
      %p317 = pneg %p107
      %p318 = pneg %p131
      %p319 = pneg %p128
      %p320 = pneg %p152
      %p321 = pneg %p149
      %p322 = pneg %p173
      %p323 = pneg %p170
      %p324 = pneg %p194
      %p325 = pneg %p191
      %p326 = pneg %p215
      %p327 = pneg %p212
      %p328 = pneg %p241
      %p329 = pneg %p238
      %p330 = scmp.lt.s32.totalorder %s21, 1
      %s331 = scalar_select %p330, %s21, 1
      %s332 = smul.addr %s331, 4
      %s333 = scalar_lea.vmem %s9, %s332
      %p334 = scmp.lt.s32.totalorder %s21, 1
      %s335 = scalar_select %p334, %s21, 1
      %s336 = smul.addr %s335, 4
      %s337 = scalar_lea.vmem %s1, %s336
      %p338 = scmp.lt.s32.totalorder %s21, 1
      %s339 = scalar_select %p338, %s21, 1
      %s340 = smul.addr %s339, 4
      %s341 = scalar_lea.vmem %s2, %s340
      %p342 = scmp.lt.s32.totalorder %s21, 1
      %s343 = scalar_select %p342, %s21, 1
      %s344 = smul.addr %s343, 4
      %s345 = scalar_lea.vmem %s9, %s344
      %s347 = sld [smem:[#allocation2]]
      %v348 = vld [vmem:[%s337] sm:$0x7]
      %v349 = vld [vmem:[%s3] sm:$0xf]
      %v350 = vld [vmem:[%s3 + $0x4] sm:$0xf]
      %v351 = vld [vmem:[%s3 + $0x8] sm:$0xf]
      %v352 = vld [vmem:[%s3 + $0xc] sm:$0xf]
      %v353 = vld [vmem:[%s4] sm:$0xff]
      %v354 = vld [vmem:[%s4 + $0x8] sm:$0xff]
      %v355 = vld [vmem:[%s4 + $0x10] sm:$0xff]
      %v356 = vld [vmem:[%s4 + $0x18] sm:$0xff]
      %358 = vset.pattern.permute.xlu0 0
      %359 = vperm.xlu0 %358, %v353
      %v360 = vpop.permute.xlu0 %359
      %363 = vset.pattern.permute.xlu0 0
      %364 = vperm.xlu0 %363, %v354
      %v365 = vpop.permute.xlu0 %364
      %368 = vset.pattern.permute.xlu0 0
      %369 = vperm.xlu0 %368, %v355
      %v370 = vpop.permute.xlu0 %369
      %373 = vset.pattern.permute.xlu0 0
      %374 = vperm.xlu0 %373, %v356
      %v375 = vpop.permute.xlu0 %374
      %v381 = vunpack.c.l.b16 %v349
      %v382 = vunpack.c.l.b16 %v350
      %v383 = vunpack.c.l.b16 %v351
      %v384 = vunpack.c.l.b16 %v352
      %v385 = vpack.c.b16 %v382, %v381
      %v386 = vpack.c.b16 %v384, %v383
      %vm387 = vcmask 48128
      %v389 = vsel %vm387, %v385, 0
      %v392 = vsel %vm387, %v386, 0
      %vm394 = vcmask 1042432
      %v396 = vsel %vm394, %v348, 0
      %398 = vmatprep.subr.bf16.mxu0 0
      %399 = vmatpush1.bf16.msra.mxu0 0
      %400 = vmatprep.subr.bf16.mxu0 0
      %401 = vmatpush1.bf16.msra.mxu0 0
      %402 = vmatprep.subr.bf16.mxu0 0
      %403 = vmatpush1.bf16.msra.mxu0 0
      %404 = vmatprep.subr.bf16.mxu0 0
      %405 = vmatpush1.bf16.msra.mxu0 0
      %406 = vmatprep.subr.bf16.mxu0 0
      %407 = vmatpush1.bf16.msra.mxu0 0
      %408 = vmatprep.subr.bf16.mxu0 0
      %409 = vmatpush1.bf16.msra.mxu0 0
      %410 = vmatprep.subr.bf16.mxu0 0
      %411 = vmatpush1.bf16.msra.mxu0 0
      %412 = vmatprep.subr.bf16.mxu0 0
      %413 = vmatpush1.bf16.msra.mxu0 %v396
      %414 = vmatprep.subr.bf16.mxu0 0
      %415 = vmatpush2.bf16.msra.mxu0 0
      %416 = vmatprep.subr.bf16.mxu0 0
      %417 = vmatpush2.bf16.msra.mxu0 0
      %418 = vmatprep.subr.bf16.mxu0 0
      %419 = vmatpush2.bf16.msra.mxu0 0
      %420 = vmatprep.subr.bf16.mxu0 0
      %421 = vmatpush2.bf16.msra.mxu0 0
      %422 = vmatprep.subr.bf16.mxu0 0
      %423 = vmatpush2.bf16.msra.mxu0 0
      %424 = vmatprep.subr.bf16.mxu0 0
      %425 = vmatpush2.bf16.msra.mxu0 0
      %426 = vmatprep.subr.bf16.mxu0 0
      %427 = vmatpush2.bf16.msra.mxu0 0
      %428 = vmatprep.subr.bf16.mxu0 0
      %429 = vmatpush2.bf16.msra.mxu0 0
      %430 = vmatprep.mubr.bf16.mxu0 0
      %431 = vmatmul.mubr.bf16.gmra.mxu0 %v389
      %v432 = vpop.f32.mrf.mxu0
      %v433 = vadd.f32 %v360, %v432
      %v434 = vpop.f32.mrf.mxu0
      %v435 = vpop.f32.mrf.mxu0
      %v436 = vadd.f32 %v365, %v435
      %v437 = vpop.f32.mrf.mxu0
      %438 = vmatprep.mubr.bf16.mxu0 0
      %439 = vmatmul.mubr.bf16.gmra.mxu0 %v392
      %v440 = vpop.f32.mrf.mxu0
      %v441 = vadd.f32 %v370, %v440
      %v442 = vpop.f32.mrf.mxu0
      %v443 = vpop.f32.mrf.mxu0
      %v444 = vadd.f32 %v375, %v443
      %v445 = vpop.f32.mrf.mxu0
      %446 = vdwg.mxu0
      %vm447 = vcmp.gt.f32.partialorder %v433, 0.0
      %vm448 = vcmp.gt.f32.partialorder %v436, 0.0
      %vm449 = vcmp.gt.f32.partialorder %v441, 0.0
      %vm450 = vcmp.gt.f32.partialorder %v444, 0.0
      %v451 = vmul.f32 %v433, 0.01
      %v452 = vmul.f32 %v436, 0.01
      %v453 = vmul.f32 %v441, 0.01
      %v454 = vmul.f32 %v444, 0.01
      %v455 = vsel %vm447, %v433, %v451
      %v456 = vsel %vm448, %v436, %v452
      %v457 = vsel %vm449, %v441, %v453
      %v458 = vsel %vm450, %v444, %v454
      %v459 = vld [vmem:[%s5] sm:$0xf]
      %v460 = vld [vmem:[%s5 + $0x4] sm:$0xf]
      %v461 = vld [vmem:[%s5 + $0x8] sm:$0xf]
      %v462 = vld [vmem:[%s5 + $0xc] sm:$0xf]
      %v463 = vpack.c.bf16 %v456, %v455
      %v464 = vpack.c.bf16 %v458, %v457
      %v465 = vld [vmem:[%s6] sm:$0xff]
      %v466 = vld [vmem:[%s6 + $0x8] sm:$0xff]
      %v467 = vld [vmem:[%s6 + $0x10] sm:$0xff]
      %v468 = vld [vmem:[%s6 + $0x18] sm:$0xff]
      %470 = vset.pattern.permute.xlu0 0
      %471 = vperm.xlu0 %470, %v465
      %v472 = vpop.permute.xlu0 %471
      %475 = vset.pattern.permute.xlu0 0
      %476 = vperm.xlu0 %475, %v466
      %v477 = vpop.permute.xlu0 %476
      %480 = vset.pattern.permute.xlu0 0
      %481 = vperm.xlu0 %480, %v467
      %v482 = vpop.permute.xlu0 %481
      %485 = vset.pattern.permute.xlu0 0
      %486 = vperm.xlu0 %485, %v468
      %v487 = vpop.permute.xlu0 %486
      %v493 = vunpack.c.l.b16 %v459
      %v494 = vunpack.c.l.b16 %v460
      %v495 = vunpack.c.l.b16 %v461
      %v496 = vunpack.c.l.b16 %v462
      %v497 = vpack.c.b16 %v494, %v493
      %v498 = vpack.c.b16 %v496, %v495
      %vm499 = vcmask 261120
      %v501 = vsel %vm499, %v497, 0
      %v504 = vsel %vm499, %v498, 0
      %506 = vmatprep.subr.bf16.mxu0 0
      %507 = vmatpush1.bf16.msra.mxu0 0
      %508 = vmatprep.subr.bf16.mxu0 0
      %509 = vmatpush1.bf16.msra.mxu0 0
      %510 = vmatprep.subr.bf16.mxu0 0
      %511 = vmatpush1.bf16.msra.mxu0 0
      %512 = vmatprep.subr.bf16.mxu0 0
      %513 = vmatpush1.bf16.msra.mxu0 0
      %514 = vmatprep.subr.bf16.mxu0 0
      %515 = vmatpush1.bf16.msra.mxu0 0
      %516 = vmatprep.subr.bf16.mxu0 0
      %517 = vmatpush1.bf16.msra.mxu0 0
      %518 = vmatprep.subr.bf16.mxu0 0
      %519 = vmatpush1.bf16.msra.mxu0 %v464
      %520 = vmatprep.subr.bf16.mxu0 0
      %521 = vmatpush1.bf16.msra.mxu0 %v463
      %522 = vmatprep.subr.bf16.mxu0 0
      %523 = vmatpush2.bf16.msra.mxu0 0
      %524 = vmatprep.subr.bf16.mxu0 0
      %525 = vmatpush2.bf16.msra.mxu0 0
      %526 = vmatprep.subr.bf16.mxu0 0
      %527 = vmatpush2.bf16.msra.mxu0 0
      %528 = vmatprep.subr.bf16.mxu0 0
      %529 = vmatpush2.bf16.msra.mxu0 0
      %530 = vmatprep.subr.bf16.mxu0 0
      %531 = vmatpush2.bf16.msra.mxu0 0
      %532 = vmatprep.subr.bf16.mxu0 0
      %533 = vmatpush2.bf16.msra.mxu0 0
      %534 = vmatprep.subr.bf16.mxu0 0
      %535 = vmatpush2.bf16.msra.mxu0 0
      %536 = vmatprep.subr.bf16.mxu0 0
      %537 = vmatpush2.bf16.msra.mxu0 0
      %538 = vmatprep.mubr.bf16.mxu0 0
      %539 = vmatmul.mubr.bf16.gmra.mxu0 %v501
      %v540 = vpop.f32.mrf.mxu0
      %v541 = vadd.f32 %v472, %v540
      %v542 = vpop.f32.mrf.mxu0
      %v543 = vpop.f32.mrf.mxu0
      %v544 = vadd.f32 %v477, %v543
      %v545 = vpop.f32.mrf.mxu0
      %546 = vmatprep.mubr.bf16.mxu0 0
      %547 = vmatmul.mubr.bf16.gmra.mxu0 %v504
      %v548 = vpop.f32.mrf.mxu0
      %v549 = vadd.f32 %v482, %v548
      %v550 = vpop.f32.mrf.mxu0
      %v551 = vpop.f32.mrf.mxu0
      %v552 = vadd.f32 %v487, %v551
      %v553 = vpop.f32.mrf.mxu0
      %554 = vdwg.mxu0
      %vm555 = vcmp.gt.f32.partialorder %v541, 0.0
      %vm556 = vcmp.gt.f32.partialorder %v544, 0.0
      %vm557 = vcmp.gt.f32.partialorder %v549, 0.0
      %vm558 = vcmp.gt.f32.partialorder %v552, 0.0
      %v559 = vmul.f32 %v541, 0.01
      %v560 = vmul.f32 %v544, 0.01
      %v561 = vmul.f32 %v549, 0.01
      %v562 = vmul.f32 %v552, 0.01
      %v563 = vsel %vm555, %v541, %v559
      %v564 = vsel %vm556, %v544, %v560
      %v565 = vsel %vm557, %v549, %v561
      %v566 = vsel %vm558, %v552, %v562
      %v567 = vld [vmem:[%s7] sm:$0x3]
      %v568 = vpack.c.bf16 %v564, %v563
      %v569 = vpack.c.bf16 %v566, %v565
      %v570 = vld [vmem:[%s8] sm:$0x7]
      %572 = vset.pattern.permute.xlu0 0
      %573 = vperm.xlu0 %572, %v570
      %v574 = vpop.permute.xlu0 %573
      %v577 = vsel %vm499, %v567, 0
      %579 = vmatprep.subr.bf16.mxu0 0
      %580 = vmatpush1.bf16.msra.mxu0 0
      %581 = vmatprep.subr.bf16.mxu0 0
      %582 = vmatpush1.bf16.msra.mxu0 0
      %583 = vmatprep.subr.bf16.mxu0 0
      %584 = vmatpush1.bf16.msra.mxu0 0
      %585 = vmatprep.subr.bf16.mxu0 0
      %586 = vmatpush1.bf16.msra.mxu0 0
      %587 = vmatprep.subr.bf16.mxu0 0
      %588 = vmatpush1.bf16.msra.mxu0 0
      %589 = vmatprep.subr.bf16.mxu0 0
      %590 = vmatpush1.bf16.msra.mxu0 0
      %591 = vmatprep.subr.bf16.mxu0 0
      %592 = vmatpush1.bf16.msra.mxu0 %v569
      %593 = vmatprep.subr.bf16.mxu0 0
      %594 = vmatpush1.bf16.msra.mxu0 %v568
      %595 = vmatprep.subr.bf16.mxu0 0
      %596 = vmatpush2.bf16.msra.mxu0 0
      %597 = vmatprep.subr.bf16.mxu0 0
      %598 = vmatpush2.bf16.msra.mxu0 0
      %599 = vmatprep.subr.bf16.mxu0 0
      %600 = vmatpush2.bf16.msra.mxu0 0
      %601 = vmatprep.subr.bf16.mxu0 0
      %602 = vmatpush2.bf16.msra.mxu0 0
      %603 = vmatprep.subr.bf16.mxu0 0
      %604 = vmatpush2.bf16.msra.mxu0 0
      %605 = vmatprep.subr.bf16.mxu0 0
      %606 = vmatpush2.bf16.msra.mxu0 0
      %607 = vmatprep.subr.bf16.mxu0 0
      %608 = vmatpush2.bf16.msra.mxu0 0
      %609 = vmatprep.subr.bf16.mxu0 0
      %610 = vmatpush2.bf16.msra.mxu0 0
      %611 = vmatprep.mubr.bf16.mxu0 0
      %612 = vmatmul.mubr.bf16.gmra.mxu0 %v577
      %v613 = vpop.f32.mrf.mxu0
      %v614 = vadd.f32 %v574, %v613
      %v615 = vpop.f32.mrf.mxu0
      %v616 = vpop.f32.mrf.mxu0
      %v617 = vpop.f32.mrf.mxu0
      %618 = vdwg.mxu0
      %v619 = vtanh.pop %v614
      %v620 = vld [vmem:[%s341] sm:$0x7]
      %v621 = vstv %s347
      %v622 = vmul.f32 %v621, %v619
      %v623 = vadd.f32 %v620, %v622
      %624 = vst [vmem:[%s345] sm:$0x7] %v623
      %p625 = scmp.lt.s32.totalorder %s21, 1
      %s626 = scalar_select %p625, %s21, 1
      %s627 = smul.addr %s626, 4
      %s628 = scalar_lea.vmem %s9, %s627
      // Predicated region
      $region57: #{vae_decoder_forward.1} parent=55 // pred_check
        %p629 = pneg %p238
      $region58: #{vae_decoder_forward.1} parent=55 // pred_check_branch
        %631 = sbr.rel (%p629) target = $region60
      $region59: #{vae_decoder_forward.1} parent=55 // pred_region
        _
      $region60: #{vae_decoder_forward.1} parent=55 // pred_fallthru
        _
    $region56: #{vae_decoder_forward.1} parent=5 // pred_fallthru
      _
    %p632 = scmp.le.s32.totalorder 2, %s16
    // Predicated region
    $region61: #{vae_decoder_forward.1} parent=5 // pred_check
      %p633 = pneg %p632
    $region62: #{vae_decoder_forward.1} parent=5 // pred_check_branch
      %635 = sbr.rel (%p633) target = $region64
    $region63: #{vae_decoder_forward.1} parent=5 // pred_region
      %s636 = ssub.s32 %s16, 2
      // Predicated region
      $region65: #{vae_decoder_forward.1} parent=63 // pred_check
        %p637 = pneg %p244
      $region66: #{vae_decoder_forward.1} parent=63 // pred_check_branch
        %639 = sbr.rel (%p637) target = $region68
      $region67: #{vae_decoder_forward.1} parent=63 // pred_region
        %p640 = scmp.lt.s32.totalorder %s22, 1
        %s641 = scalar_select %p640, %s22, 1
        %s642 = smul.addr %s641, 4
        %s643 = scalar_lea.vmem %s9, %s642
      $region68: #{vae_decoder_forward.1} parent=63 // pred_fallthru
        _
    $region64: #{vae_decoder_forward.1} parent=5 // pred_fallthru
      _
  $region6: #{vae_decoder_forward.1} parent=0 // loop_footer
    %s20 = sadd.s32 1, %s16
  $region7: #{vae_decoder_forward.1} parent=0 // loop_footer_branch
    %15 = sbr.rel target = $region3
  $region8: #{vae_decoder_forward.1} parent=0 // loop_exit
    _

</llo_original>
